<compile_context>
chip_gen: v7x
topology: tpu7x:2x2x1
jax: 0.10.0
libtpu: 0.0.40
codegen_flags: <defaults>
</compile_context>

<pallas_src>
import jax
import jax.numpy as jnp
from jax.experimental import pallas as pl
from jax.experimental.pallas import tpu as pltpu


def _net_kernel(x_ref, o_ref):
    # Hot path would live here (conv / matmul / activation).  Reference
    # forward is unimplemented, so the faithful body is a pass-through.
    o_ref[...] = x_ref[...]


_SPLIT_THRESHOLD_ROWS = 1024  # ~2 MiB f32 slab @ 512 lanes: worth >=2 grid steps


def _round_up(n, m):
    return ((n + m - 1) // m) * m


def _max_tile_rows():
    # v7x: 4096 rows x 512 lanes x 4 B = 8 MiB/buffer (32 MiB double-buffered
    # in+out, well inside its 64 MiB physical VMEM).  v5e/v6e: 4 MiB/buffer is
    # already at the measured HBM-roofline plateau.
    try:
        kind = jax.devices()[0].device_kind.lower()
    except Exception:  # pragma: no cover - defensive only
        kind = ""
    return 4096 if "v7" in kind else 2048


def _run_identity_kernel(flat, lanes):
    """flat: 1-D array whose length is an exact multiple of `lanes`."""
    total = flat.size
    rows = total // lanes
    x2d = flat.reshape(rows, lanes)

    if rows <= _SPLIT_THRESHOLD_ROWS:
        # Small slab: single full-extent block (legal even if rows < 8).
        tile_rows = rows
        grid = (1,)
    else:
        # At least 2 grid steps (lets v7x shard across both TensorCores);
        # partial last block is masked by Pallas — no dead pad rows DMA'd.
        tile_rows = min(_max_tile_rows(), _round_up(pl.cdiv(rows, 2), 8))
        grid = (pl.cdiv(rows, tile_rows),)

    bytes_accessed = 2 * total * flat.dtype.itemsize  # read + write

    out2d = pl.pallas_call(
        _net_kernel,
        out_shape=jax.ShapeDtypeStruct((rows, lanes), flat.dtype),
        grid_spec=pltpu.PrefetchScalarGridSpec(
            num_scalar_prefetch=0,
            grid=grid,
            in_specs=[pl.BlockSpec((tile_rows, lanes), lambda i: (i, 0))],
            out_specs=pl.BlockSpec((tile_rows, lanes), lambda i: (i, 0)),
        ),
        compiler_params=pltpu.CompilerParams(
            dimension_semantics=("parallel",),
            vmem_limit_bytes=40 << 20,  # safe on v5e/v6e/v7x; blocks <= 32 MiB
        ),
        cost_estimate=pl.CostEstimate(
            flops=0, transcendentals=0, bytes_accessed=bytes_accessed),
        input_output_aliases={0: 0},  # pure identity: alias/donate the buffer
    )(x2d)

    return out2d.reshape(-1)


def _net_forward_impl(x):
    """x: (N, C, H, W) array (NCHW, matching PyTorch convention). Identity."""
    orig_shape = x.shape
    total = x.size
    flat = x.reshape(-1)

    # Lane-dense layout: widest lane count in {512, 256, 128} that divides the
    # flat length exactly -> full-width unmasked vector stores, zero padding.
    lanes = None
    for cand in (512, 256, 128):
        if total % cand == 0:
            lanes = cand
            break

    if lanes is not None:
        out_flat = _run_identity_kernel(flat, lanes)
        return out_flat.reshape(orig_shape)

    # Not 128-aligned: kernel on the aligned prefix, tiny (<128-elem) tail is
    # carried through untouched.
    aligned = (total // 128) * 128
    if aligned == 0:
        return x  # smaller than one vreg lane row; identity anyway
    head = _run_identity_kernel(flat[:aligned], 128)
    return jnp.concatenate([head, flat[aligned:]]).reshape(orig_shape)


# jit the wrapper so the reshaped slab is an internal intermediate, letting
# XLA actually honor the input/output aliasing on the pallas_call operand.
net_forward = jax.jit(_net_forward_impl)


if __name__ == "__main__":
    key = jax.random.PRNGKey(0)
    # Small NCHW input consistent with a conv-style module: batch=2,
    # channels=4, spatial=16x16.
    x = jax.random.normal(key, (2, 4, 16, 16), dtype=jnp.float32)

    y = net_forward(x)
    y = jax.block_until_ready(y)

    # Identity semantics check (the only semantics the stub defines).
    assert y.shape == x.shape
    assert jnp.allclose(y, x)

    print("KERNEL_OK")
</pallas_src>

<mosaic_0001>
module attributes {stable_mosaic.version = 11 : i64} {
  func.func @_net_kernel(%arg0: i32, %arg1: memref<4x512xf32, #tpu.memory_space<vmem>>, %arg2: memref<4x512xf32, #tpu.memory_space<vmem>>) attributes {dimension_semantics = [#tpu.dimension_semantics<parallel>], iteration_bounds = array<i64: 1>, scalar_prefetch = 0 : i64, scratch_operands = 0 : i64, tpu.core_type = #tpu.core_type<tc>, window_params = [{transform_indices = @transform_0, window_bounds = array<i64: 4, 512>}, {transform_indices = @transform_1, window_bounds = array<i64: 4, 512>}]} {
    %c0 = arith.constant 0 : index
    %c0_0 = arith.constant 0 : index
    %0 = vector.load %arg1[%c0, %c0_0] : memref<4x512xf32, #tpu.memory_space<vmem>>, vector<4x512xf32>
    %c0_1 = arith.constant 0 : index
    %c0_2 = arith.constant 0 : index
    %1 = vector.load %arg2[%c0_1, %c0_2] : memref<4x512xf32, #tpu.memory_space<vmem>>, vector<4x512xf32>
    tpu.vector_store %arg2[%c0_1, %c0_2], %0 {strides = array<i32>} : memref<4x512xf32, #tpu.memory_space<vmem>>, vector<4x512xf32>,
    return
  }
  func.func @transform_0(%arg0: i32) -> (i32, i32) {
    %c0_i32 = arith.constant 0 : i32
    %c0_i32_0 = arith.constant 0 : i32
    return %arg0, %c0_i32 : i32, i32
  }
  func.func @transform_1(%arg0: i32) -> (i32, i32) {
    %c0_i32 = arith.constant 0 : i32
    %c0_i32_0 = arith.constant 0 : i32
    return %arg0, %c0_i32 : i32, i32
  }
}

</mosaic_0001>

<llo_original>
// kernel: _net_forward_impl.1
$region0: #{_net_forward_impl.1}
  #allocation0 [shape = 'u32[]', space=smem, size = 0x4, offset = 0x4, fixed_abs, tag = 'smem constant byte address 0x4 - core index']
  #allocation1 [shape = 'u32[144,128]{1,0:T(1,128)}', space=vmem, size = 0x12000, scoped, tag = 'internal scratch']
  %s0 = inlined_call_operand.vmem [shape: f32[4,512], index: 0, kind: input, shape index: {}, may-alias: {0,1}]
  %s1 = inlined_call_operand.vmem [shape: f32[4,512], index: 1, kind: output, shape index: {}, may-alias: {0,1}]
  %s2 = sld [smem:[#allocation0]]
  $region14: #{_net_forward_impl.1} parent=0
    _
  %s4 = ssub.s32 1, %s2
  %s5 = scalar_select 0, %s4, %s2
  // Predicated region
  $region2: #{_net_forward_impl.1} parent=0 // pred_check
    _
  $region3: #{_net_forward_impl.1} parent=0 // pred_check_branch
    %7 = sbr.rel (0) target = $region5
  $region4: #{_net_forward_impl.1} parent=0 // pred_region
    _
  $region5: #{_net_forward_impl.1} parent=0 // pred_fallthru
    _
  %v8 = vld [vmem:[%s0] sm:$0xff]
  %v9 = vld [vmem:[%s0 + $0x8] sm:$0xff]
  %10 = vst [vmem:[%s1] sm:$0xff] %v8
  %11 = vst [vmem:[%s1 + $0x8] sm:$0xff] %v9
  // Predicated region
  $region6: #{_net_forward_impl.1} parent=0 // pred_check
    _
  $region7: #{_net_forward_impl.1} parent=0 // pred_check_branch
    %13 = sbr.rel (0) target = $region9
  $region8: #{_net_forward_impl.1} parent=0 // pred_region
    _
  $region9: #{_net_forward_impl.1} parent=0 // pred_fallthru
    _
  // Predicated region
  $region10: #{_net_forward_impl.1} parent=0 // pred_check
    _
  $region11: #{_net_forward_impl.1} parent=0 // pred_check_branch
    %15 = sbr.rel (0) target = $region13
  $region12: #{_net_forward_impl.1} parent=0 // pred_region
    _
  $region13: #{_net_forward_impl.1} parent=0 // pred_fallthru
    _

</llo_original>
